<compile_context>
chip_gen: v7x
topology: tpu7x:2x2x1
jax: 0.10.0
libtpu: 0.0.40
codegen_flags: <defaults>
</compile_context>

<pallas_src>
import jax
import jax.numpy as jnp
from jax.experimental import pallas as pl
from jax.experimental.pallas import tpu as pltpu

EPS = 1e-5


def _mlp_kernel(x_ref,
                w1_ref, g1_ref, bt1_ref,
                w2_ref, g2_ref, bt2_ref,
                w3_ref, b3_ref,
                o_ref):
    inv_b = jnp.float32(1.0 / x_ref.shape[0])

    def bn_relu(h, g_row, b_row):
        # train-mode BatchNorm1d (biased variance) fused with relu.
        mu = jnp.sum(h, axis=0, keepdims=True) * inv_b
        var = jnp.sum(h * h, axis=0, keepdims=True) * inv_b - mu * mu
        scale = g_row * jax.lax.rsqrt(var + EPS)          # EUP rsqrt
        shift = b_row - mu * scale
        return jnp.maximum(h * scale + shift, 0.0)

    # ---- fc1 (bias cancelled by BN mean) + bn1 + relu ----
    h = jnp.dot(x_ref[...].astype(jnp.bfloat16), w1_ref[...],
                preferred_element_type=jnp.float32)
    h = bn_relu(h, g1_ref[...], bt1_ref[...])

    # ---- fc2 (bias cancelled by BN mean) + bn2 + relu ----
    h = jnp.dot(h.astype(jnp.bfloat16), w2_ref[...],
                preferred_element_type=jnp.float32)
    h = bn_relu(h, g2_ref[...], bt2_ref[...])

    # ---- fc3: N=1 output -> VPU multiply + lane reduce (skip the MXU) ----
    o_ref[...] = (jnp.sum(h * w3_ref[...], axis=-1, keepdims=True)
                  + b3_ref[...]).astype(o_ref.dtype)


def state_value_approximator(state, kparams):
    """state: [B, obs_dim] float32.  Returns [B, 1] float32."""
    B, _ = state.shape
    w1, g1, bt1, w2, g2, bt2, w3, b3 = kparams

    # VMEM safeguard for large batches (f32 input + bf16 weights + f32
    # activations for both hidden layers, plus slack for temporaries).
    h1 = w1.shape[1]
    h2 = w2.shape[1]
    needed = (state.size * 4 + w1.size * 2 + w2.size * 2
              + B * (h1 + h2) * 4 * 4 + 64 * 1024)
    compiler_params = None
    if needed > 32 * 1024 * 1024:
        compiler_params = pltpu.CompilerParams(
            vmem_limit_bytes=int(min(2 * needed, 64 * 1024 * 1024)))

    vmem = pl.BlockSpec(memory_space=pltpu.MemorySpace.VMEM)
    return pl.pallas_call(
        _mlp_kernel,
        out_shape=jax.ShapeDtypeStruct((B, 1), jnp.float32),
        in_specs=[vmem] * 9,
        out_specs=vmem,
        compiler_params=compiler_params,
    )(state, w1, g1, bt1, w2, g2, bt2, w3, b3)


def init_params(key, obs_dim, h1=512, h2=256):
    """f32 master params mirroring PyTorch defaults' structure:
    Linear: U(-1/sqrt(fan_in), 1/sqrt(fan_in)) for W and b (W stored [in,out],
    fc3 weight kept as a (1, h2) row); BatchNorm1d: gamma=1, beta=0."""
    ks = jax.random.split(key, 6)

    def lin(kw, kb, fan_in, fan_out):
        bound = 1.0 / jnp.sqrt(jnp.float32(fan_in))
        w = jax.random.uniform(kw, (fan_in, fan_out), jnp.float32, -bound, bound)
        b = jax.random.uniform(kb, (1, fan_out), jnp.float32, -bound, bound)
        return w, b

    w1, b1 = lin(ks[0], ks[1], obs_dim, h1)
    w2, b2 = lin(ks[2], ks[3], h1, h2)
    w3c, b3 = lin(ks[4], ks[5], h2, 1)          # (h2, 1)
    return dict(
        w1=w1, b1=b1, g1=jnp.ones((1, h1), jnp.float32),
        bt1=jnp.zeros((1, h1), jnp.float32),
        w2=w2, b2=b2, g2=jnp.ones((1, h2), jnp.float32),
        bt2=jnp.zeros((1, h2), jnp.float32),
        w3=w3c.reshape(1, h2), b3=b3.reshape(1, 1),
    )


def pack_kernel_params(p):
    """Kernel-side parameter pack: bf16 matmul weights, f32 BN rows, f32 fc3
    row + bias.  fc1/fc2 biases intentionally excluded (dead under BN)."""
    return (p["w1"].astype(jnp.bfloat16), p["g1"], p["bt1"],
            p["w2"].astype(jnp.bfloat16), p["g2"], p["bt2"],
            p["w3"], p["b3"])


def _reference_matched(state, kparams):
    """Pure-JAX reference at the kernel's precision (bf16 matmul inputs, f32
    accumulation/statistics, no fc1/fc2 bias)."""
    w1, g1, bt1, w2, g2, bt2, w3, b3 = kparams
    h = jnp.dot(state.astype(jnp.bfloat16), w1, preferred_element_type=jnp.float32)
    h = (h - h.mean(0, keepdims=True)) * jax.lax.rsqrt(h.var(0, keepdims=True) + EPS)
    h = jnp.maximum(h * g1 + bt1, 0.0)
    h = jnp.dot(h.astype(jnp.bfloat16), w2, preferred_element_type=jnp.float32)
    h = (h - h.mean(0, keepdims=True)) * jax.lax.rsqrt(h.var(0, keepdims=True) + EPS)
    h = jnp.maximum(h * g2 + bt2, 0.0)
    return jnp.sum(h * w3, axis=-1, keepdims=True) + b3


def _reference_f32(state, p):
    """Full-f32 reference of the original module (train-mode BN), INCLUDING
    the fc1/fc2 biases, to demonstrate semantic parity of the fused kernel."""
    h = state @ p["w1"] + p["b1"]
    h = (h - h.mean(0, keepdims=True)) / jnp.sqrt(h.var(0, keepdims=True) + EPS)
    h = jnp.maximum(h * p["g1"] + p["bt1"], 0.0)
    h = h @ p["w2"] + p["b2"]
    h = (h - h.mean(0, keepdims=True)) / jnp.sqrt(h.var(0, keepdims=True) + EPS)
    h = jnp.maximum(h * p["g2"] + p["bt2"], 0.0)
    return jnp.sum(h * p["w3"], axis=-1, keepdims=True) + p["b3"]


if __name__ == "__main__":
    key = jax.random.PRNGKey(0)
    k_param, k_state = jax.random.split(key)

    B, OBS_DIM = 8, 64  # small batch of flattened observations
    params = init_params(k_param, OBS_DIM)
    kparams = pack_kernel_params(params)
    state = jax.random.normal(k_state, (B, OBS_DIM), jnp.float32)

    out = jax.block_until_ready(state_value_approximator(state, kparams))
    assert out.shape == (B, 1), out.shape

    # Tight check vs a precision-matched pure-JAX implementation.
    ref_m = _reference_matched(state, kparams)
    assert jnp.allclose(out, ref_m, atol=2e-3, rtol=2e-3), (out, ref_m)

    # Looser check vs exact f32 module semantics (bf16 matmul quantization is
    # the only difference; fc1/fc2 bias removal is exact under BN).
    ref_f = _reference_f32(state, params)
    assert jnp.allclose(out, ref_f, atol=5e-2, rtol=5e-2), (out, ref_f)

    print("KERNEL_OK")
</pallas_src>

<mosaic_0001>
module attributes {stable_mosaic.version = 11 : i64} {
  func.func @_mlp_kernel(%arg0: memref<8x64xf32, #tpu.memory_space<vmem>>, %arg1: memref<64x512xbf16, #tpu.memory_space<vmem>>, %arg2: memref<1x512xf32, #tpu.memory_space<vmem>>, %arg3: memref<1x512xf32, #tpu.memory_space<vmem>>, %arg4: memref<512x256xbf16, #tpu.memory_space<vmem>>, %arg5: memref<1x256xf32, #tpu.memory_space<vmem>>, %arg6: memref<1x256xf32, #tpu.memory_space<vmem>>, %arg7: memref<1x256xf32, #tpu.memory_space<vmem>>, %arg8: memref<1x1xf32, #tpu.memory_space<vmem>>, %arg9: memref<8x1xf32, #tpu.memory_space<vmem>>) attributes {dimension_semantics = [], scalar_prefetch = 0 : i64, scratch_operands = 0 : i64, tpu.core_type = #tpu.core_type<tc>} {
    %c0 = arith.constant 0 : index
    %c0_0 = arith.constant 0 : index
    %0 = vector.load %arg0[%c0, %c0_0] : memref<8x64xf32, #tpu.memory_space<vmem>>, vector<8x64xf32>
    %1 = arith.truncf %0 : vector<8x64xf32> to vector<8x64xbf16>
    %c0_1 = arith.constant 0 : index
    %c0_2 = arith.constant 0 : index
    %2 = vector.load %arg1[%c0_1, %c0_2] : memref<64x512xbf16, #tpu.memory_space<vmem>>, vector<64x512xbf16>
    %cst = arith.constant dense<0.000000e+00> : vector<8x512xf32>
    %3 = tpu.matmul %1, %2, %cst {dimension_numbers = #tpu.dot_dimension_numbers<[1], [0], [0], [1], [0, 0, 1, 1], [], []>} : vector<8x64xbf16>, vector<64x512xbf16>, vector<8x512xf32> -> vector<8x512xf32>
    %c0_3 = arith.constant 0 : index
    %c0_4 = arith.constant 0 : index
    %4 = vector.load %arg2[%c0_3, %c0_4] : memref<1x512xf32, #tpu.memory_space<vmem>>, vector<1x512xf32>
    %c0_5 = arith.constant 0 : index
    %c0_6 = arith.constant 0 : index
    %5 = vector.load %arg3[%c0_5, %c0_6] : memref<1x512xf32, #tpu.memory_space<vmem>>, vector<1x512xf32>
    %cst_7 = arith.constant dense<0.000000e+00> : vector<512xf32>
    %6 = vector.multi_reduction <add>, %3, %cst_7 [0] : vector<8x512xf32> to vector<512xf32>
    %7 = vector.shape_cast %6 : vector<512xf32> to vector<1x512xf32>
    %cst_8 = arith.constant 1.250000e-01 : f32
    %8 = vector.broadcast %cst_8 : f32 to vector<1x512xf32>
    %9 = arith.mulf %7, %8 : vector<1x512xf32>
    %10 = arith.mulf %3, %3 : vector<8x512xf32>
    %cst_9 = arith.constant dense<0.000000e+00> : vector<512xf32>
    %11 = vector.multi_reduction <add>, %10, %cst_9 [0] : vector<8x512xf32> to vector<512xf32>
    %12 = vector.shape_cast %11 : vector<512xf32> to vector<1x512xf32>
    %cst_10 = arith.constant 1.250000e-01 : f32
    %13 = vector.broadcast %cst_10 : f32 to vector<1x512xf32>
    %14 = arith.mulf %12, %13 : vector<1x512xf32>
    %15 = arith.mulf %9, %9 : vector<1x512xf32>
    %16 = arith.subf %14, %15 : vector<1x512xf32>
    %cst_11 = arith.constant 9.99999974E-6 : f32
    %17 = vector.broadcast %cst_11 : f32 to vector<1x512xf32>
    %18 = arith.addf %16, %17 : vector<1x512xf32>
    %19 = math.rsqrt %18 : vector<1x512xf32>
    %20 = arith.mulf %4, %19 : vector<1x512xf32>
    %21 = arith.mulf %9, %20 : vector<1x512xf32>
    %22 = arith.subf %5, %21 : vector<1x512xf32>
    %23 = vector.broadcast %20 : vector<1x512xf32> to vector<8x512xf32>
    %24 = arith.mulf %3, %23 : vector<8x512xf32>
    %25 = vector.broadcast %22 : vector<1x512xf32> to vector<8x512xf32>
    %26 = arith.addf %24, %25 : vector<8x512xf32>
    %cst_12 = arith.constant 0.000000e+00 : f32
    %27 = vector.broadcast %cst_12 : f32 to vector<8x512xf32>
    %28 = arith.maximumf %26, %27 : vector<8x512xf32>
    %29 = arith.truncf %28 : vector<8x512xf32> to vector<8x512xbf16>
    %c0_13 = arith.constant 0 : index
    %c0_14 = arith.constant 0 : index
    %30 = vector.load %arg4[%c0_13, %c0_14] : memref<512x256xbf16, #tpu.memory_space<vmem>>, vector<512x256xbf16>
    %cst_15 = arith.constant dense<0.000000e+00> : vector<8x256xf32>
    %31 = tpu.matmul %29, %30, %cst_15 {dimension_numbers = #tpu.dot_dimension_numbers<[1], [0], [0], [1], [0, 0, 1, 1], [], []>} : vector<8x512xbf16>, vector<512x256xbf16>, vector<8x256xf32> -> vector<8x256xf32>
    %c0_16 = arith.constant 0 : index
    %c0_17 = arith.constant 0 : index
    %32 = vector.load %arg5[%c0_16, %c0_17] : memref<1x256xf32, #tpu.memory_space<vmem>>, vector<1x256xf32>
    %c0_18 = arith.constant 0 : index
    %c0_19 = arith.constant 0 : index
    %33 = vector.load %arg6[%c0_18, %c0_19] : memref<1x256xf32, #tpu.memory_space<vmem>>, vector<1x256xf32>
    %cst_20 = arith.constant dense<0.000000e+00> : vector<256xf32>
    %34 = vector.multi_reduction <add>, %31, %cst_20 [0] : vector<8x256xf32> to vector<256xf32>
    %35 = vector.shape_cast %34 : vector<256xf32> to vector<1x256xf32>
    %cst_21 = arith.constant 1.250000e-01 : f32
    %36 = vector.broadcast %cst_21 : f32 to vector<1x256xf32>
    %37 = arith.mulf %35, %36 : vector<1x256xf32>
    %38 = arith.mulf %31, %31 : vector<8x256xf32>
    %cst_22 = arith.constant dense<0.000000e+00> : vector<256xf32>
    %39 = vector.multi_reduction <add>, %38, %cst_22 [0] : vector<8x256xf32> to vector<256xf32>
    %40 = vector.shape_cast %39 : vector<256xf32> to vector<1x256xf32>
    %cst_23 = arith.constant 1.250000e-01 : f32
    %41 = vector.broadcast %cst_23 : f32 to vector<1x256xf32>
    %42 = arith.mulf %40, %41 : vector<1x256xf32>
    %43 = arith.mulf %37, %37 : vector<1x256xf32>
    %44 = arith.subf %42, %43 : vector<1x256xf32>
    %cst_24 = arith.constant 9.99999974E-6 : f32
    %45 = vector.broadcast %cst_24 : f32 to vector<1x256xf32>
    %46 = arith.addf %44, %45 : vector<1x256xf32>
    %47 = math.rsqrt %46 : vector<1x256xf32>
    %48 = arith.mulf %32, %47 : vector<1x256xf32>
    %49 = arith.mulf %37, %48 : vector<1x256xf32>
    %50 = arith.subf %33, %49 : vector<1x256xf32>
    %51 = vector.broadcast %48 : vector<1x256xf32> to vector<8x256xf32>
    %52 = arith.mulf %31, %51 : vector<8x256xf32>
    %53 = vector.broadcast %50 : vector<1x256xf32> to vector<8x256xf32>
    %54 = arith.addf %52, %53 : vector<8x256xf32>
    %cst_25 = arith.constant 0.000000e+00 : f32
    %55 = vector.broadcast %cst_25 : f32 to vector<8x256xf32>
    %56 = arith.maximumf %54, %55 : vector<8x256xf32>
    %c0_26 = arith.constant 0 : index
    %c0_27 = arith.constant 0 : index
    %57 = vector.load %arg7[%c0_26, %c0_27] : memref<1x256xf32, #tpu.memory_space<vmem>>, vector<1x256xf32>
    %58 = vector.broadcast %57 : vector<1x256xf32> to vector<8x256xf32>
    %59 = arith.mulf %56, %58 : vector<8x256xf32>
    %cst_28 = arith.constant dense<0.000000e+00> : vector<8xf32>
    %60 = vector.multi_reduction <add>, %59, %cst_28 [1] : vector<8x256xf32> to vector<8xf32>
    %61 = vector.shape_cast %60 : vector<8xf32> to vector<8x1xf32>
    %c0_29 = arith.constant 0 : index
    %c0_30 = arith.constant 0 : index
    %62 = vector.load %arg8[%c0_29, %c0_30] : memref<1x1xf32, #tpu.memory_space<vmem>>, vector<1x1xf32>
    %63 = vector.broadcast %62 : vector<1x1xf32> to vector<8x1xf32>
    %64 = arith.addf %61, %63 : vector<8x1xf32>
    %c0_31 = arith.constant 0 : index
    %c0_32 = arith.constant 0 : index
    %65 = vector.load %arg9[%c0_31, %c0_32] : memref<8x1xf32, #tpu.memory_space<vmem>>, vector<8x1xf32>
    tpu.vector_store %arg9[%c0_31, %c0_32], %64 {strides = array<i32>} : memref<8x1xf32, #tpu.memory_space<vmem>>, vector<8x1xf32>,
    return
  }
}

</mosaic_0001>

<llo_original>
// kernel: tpu_custom_call.1
$region0: #{tpu_custom_call.1}
  #allocation0 [shape = 'u32[]', space=smem, size = 0x4, offset = 0x4, fixed_abs, tag = 'smem constant byte address 0x4 - core index']
  #allocation1 [shape = 'u32[144,128]{1,0:T(1,128)}', space=vmem, size = 0x12000, scoped, tag = 'internal scratch']
  #allocation2 [shape = 'f32[1,1]{1,0:T(1,128)S(1)}', space=vmem, size = 0x200, scoped, tag = 'scoped memory for tpu_custom_call.1']
  %s0 = inlined_call_operand.hbm [shape: f32[8,64], index: 0, kind: input, shape index: {}]
  %s1 = inlined_call_operand.hbm [shape: bf16[64,512], index: 1, kind: input, shape index: {}]
  %s2 = inlined_call_operand.vmem [shape: f32[1,512], index: 2, kind: input, shape index: {}]
  %s3 = inlined_call_operand.vmem [shape: f32[1,512], index: 3, kind: input, shape index: {}]
  %s4 = inlined_call_operand.hbm [shape: bf16[512,256], index: 4, kind: input, shape index: {}]
  %s5 = inlined_call_operand.vmem [shape: f32[1,256], index: 5, kind: input, shape index: {}]
  %s6 = inlined_call_operand.vmem [shape: f32[1,256], index: 6, kind: input, shape index: {}]
  %s7 = inlined_call_operand.vmem [shape: f32[1,256], index: 7, kind: input, shape index: {}]
  %s8 = inlined_call_operand.<no memory space> [shape: f32[1,1], index: 8, kind: input, shape index: {}]
  %s9 = inlined_call_operand.vmem [shape: f32[8,1], index: 9, kind: output, shape index: {}]
  %s10 = sld [smem:[#allocation0]]
  $region58: #{tpu_custom_call.1} parent=0
    _
  %s12 = ssub.s32 1, %s10
  %s13 = scalar_select 0, %s12, %s10
  %v14 = vstv %s8
  %15 = vst [vmem:[#allocation2] sm:$0x1] %v14
  $region1: #{tpu_custom_call.1} parent=0
    #allocation3 [shape = 'u8[4096]{0}', space=vmem, size = 0x1000, scoped, tag = 'input window, operand 0, single buffered']
    #allocation4 [shape = 's32[1]{0}', space=sflag, size = 0x4, scoped, tag = 'scoped memory for tpu_custom_call.1']
    #allocation5 [shape = 'u8[65536]{0}', space=vmem, size = 0x10000, scoped, tag = 'input window, operand 1, single buffered']
    #allocation6 [shape = 's32[1]{0}', space=sflag, size = 0x4, scoped, tag = 'scoped memory for tpu_custom_call.1']
    #allocation7 [shape = 'u8[262144]{0}', space=vmem, size = 0x40000, scoped, tag = 'input window, operand 4, single buffered']
    %16 = vsyncpa [#allocation4], 0
    %17 = vsyncpa [#allocation6], 0
    // Predicated region
    $region2: #{tpu_custom_call.1} parent=1 // pred_check
      _
    $region3: #{tpu_custom_call.1} parent=1 // pred_check_branch
      %19 = sbr.rel (0) target = $region5
    $region4: #{tpu_custom_call.1} parent=1 // pred_region
      %s21 = ssub.s32 128, 128
      %22 = vsyncadd [#allocation4], %s21
      %s24 = sshll.u32 [#allocation3], 4
      %s25 = int_to_ptr.vmem [resolvable:$true] %s24
      %27 = dma.hbm_to_vmem [thread:$0]  %s0, 128, %s25, [#allocation4]
    $region5: #{tpu_custom_call.1} parent=1 // pred_fallthru
      _
    // Predicated region
    $region6: #{tpu_custom_call.1} parent=1 // pred_check
      _
    $region7: #{tpu_custom_call.1} parent=1 // pred_check_branch
      %29 = sbr.rel (0) target = $region9
    $region8: #{tpu_custom_call.1} parent=1 // pred_region
      %s31 = ssub.s32 2048, 2048
      %32 = vsyncadd [#allocation6], %s31
      %s33 = sshll.u32 [#allocation5], 4
      %s34 = int_to_ptr.vmem [resolvable:$true] %s33
      %39 = dma.hbm_to_vmem [thread:$0]  %s1, 2048, %s34, [#allocation6], 256, 256, 16
    $region9: #{tpu_custom_call.1} parent=1 // pred_fallthru
      _
    // Predicated region
    $region10: #{tpu_custom_call.1} parent=1 // pred_check
      _
    $region11: #{tpu_custom_call.1} parent=1 // pred_check_branch
      %41 = sbr.rel (0) target = $region13
    $region12: #{tpu_custom_call.1} parent=1 // pred_region
      _
    $region13: #{tpu_custom_call.1} parent=1 // pred_fallthru
      _
    // Predicated region
    $region14: #{tpu_custom_call.1} parent=1 // pred_check
      _
    $region15: #{tpu_custom_call.1} parent=1 // pred_check_branch
      %43 = sbr.rel (0) target = $region17
    $region16: #{tpu_custom_call.1} parent=1 // pred_region
      _
    $region17: #{tpu_custom_call.1} parent=1 // pred_fallthru
      _
    // Predicated region
    $region18: #{tpu_custom_call.1} parent=1 // pred_check
      _
    $region19: #{tpu_custom_call.1} parent=1 // pred_check_branch
      %45 = sbr.rel (0) target = $region21
    $region20: #{tpu_custom_call.1} parent=1 // pred_region
      %s47 = ssub.s32 8192, 8192
      %48 = vsyncadd [#allocation6], %s47
      %s49 = sshll.u32 [#allocation7], 4
      %s50 = int_to_ptr.vmem [resolvable:$true] %s49
      %55 = dma.hbm_to_vmem [thread:$0]  %s4, 8192, %s50, [#allocation6], 128, 128, 8
    $region21: #{tpu_custom_call.1} parent=1 // pred_fallthru
      _
    // Predicated region
    $region22: #{tpu_custom_call.1} parent=1 // pred_check
      _
    $region23: #{tpu_custom_call.1} parent=1 // pred_check_branch
      %57 = sbr.rel (0) target = $region25
    $region24: #{tpu_custom_call.1} parent=1 // pred_region
      _
    $region25: #{tpu_custom_call.1} parent=1 // pred_fallthru
      _
    // Predicated region
    $region26: #{tpu_custom_call.1} parent=1 // pred_check
      _
    $region27: #{tpu_custom_call.1} parent=1 // pred_check_branch
      %59 = sbr.rel (0) target = $region29
    $region28: #{tpu_custom_call.1} parent=1 // pred_region
      _
    $region29: #{tpu_custom_call.1} parent=1 // pred_fallthru
      _
    // Predicated region
    $region30: #{tpu_custom_call.1} parent=1 // pred_check
      _
    $region31: #{tpu_custom_call.1} parent=1 // pred_check_branch
      %61 = sbr.rel (0) target = $region33
    $region32: #{tpu_custom_call.1} parent=1 // pred_region
      _
    $region33: #{tpu_custom_call.1} parent=1 // pred_fallthru
      _
    // Predicated region
    $region34: #{tpu_custom_call.1} parent=1 // pred_check
      _
    $region35: #{tpu_custom_call.1} parent=1 // pred_check_branch
      %63 = sbr.rel (0) target = $region37
    $region36: #{tpu_custom_call.1} parent=1 // pred_region
      _
    $region37: #{tpu_custom_call.1} parent=1 // pred_fallthru
      _
    // Predicated region
    $region38: #{tpu_custom_call.1} parent=1 // pred_check
      _
    $region39: #{tpu_custom_call.1} parent=1 // pred_check_branch
      %65 = sbr.rel (0) target = $region41
    $region40: #{tpu_custom_call.1} parent=1 // pred_region
      %66 = dma.done [#allocation4], 128
    $region41: #{tpu_custom_call.1} parent=1 // pred_fallthru
      _
    // Predicated region
    $region42: #{tpu_custom_call.1} parent=1 // pred_check
      _
    $region43: #{tpu_custom_call.1} parent=1 // pred_check_branch
      %68 = sbr.rel (0) target = $region45
    $region44: #{tpu_custom_call.1} parent=1 // pred_region
      %69 = dma.done [#allocation6], 2048
    $region45: #{tpu_custom_call.1} parent=1 // pred_fallthru
      _
    // Predicated region
    $region46: #{tpu_custom_call.1} parent=1 // pred_check
      _
    $region47: #{tpu_custom_call.1} parent=1 // pred_check_branch
      %71 = sbr.rel (0) target = $region49
    $region48: #{tpu_custom_call.1} parent=1 // pred_region
      %72 = dma.done [#allocation6], 8192
    $region49: #{tpu_custom_call.1} parent=1 // pred_fallthru
      _
    %v74 = vld [vmem:[#allocation3] sm:$0xff]
    %v75 = vpack.c.bf16 %v74, %v74
    %v76 = vld [vmem:[#allocation5] sm:$0xff]
    %v77 = vld [vmem:[#allocation5 + $0x8] sm:$0xff]
    %v78 = vld [vmem:[#allocation5 + $0x10] sm:$0xff]
    %v79 = vld [vmem:[#allocation5 + $0x18] sm:$0xff]
    %v80 = vld [vmem:[#allocation5 + $0x20] sm:$0xff]
    %v81 = vld [vmem:[#allocation5 + $0x28] sm:$0xff]
    %v82 = vld [vmem:[#allocation5 + $0x30] sm:$0xff]
    %v83 = vld [vmem:[#allocation5 + $0x38] sm:$0xff]
    %v84 = vld [vmem:[#allocation5 + $0x40] sm:$0xff]
    %v85 = vld [vmem:[#allocation5 + $0x48] sm:$0xff]
    %v86 = vld [vmem:[#allocation5 + $0x50] sm:$0xff]
    %v87 = vld [vmem:[#allocation5 + $0x58] sm:$0xff]
    %v88 = vld [vmem:[#allocation5 + $0x60] sm:$0xff]
    %v89 = vld [vmem:[#allocation5 + $0x68] sm:$0xff]
    %v90 = vld [vmem:[#allocation5 + $0x70] sm:$0xff]
    %v91 = vld [vmem:[#allocation5 + $0x78] sm:$0xff]
    %v108 = vunpack.c.l.b16 %v76
    %v109 = vunpack.c.h.b16 %v76
    %v110 = vunpack.c.l.b16 %v77
    %v111 = vunpack.c.h.b16 %v77
    %v112 = vunpack.c.l.b16 %v78
    %v113 = vunpack.c.h.b16 %v78
    %v114 = vunpack.c.l.b16 %v79
    %v115 = vunpack.c.h.b16 %v79
    %v116 = vunpack.c.l.b16 %v80
    %v117 = vunpack.c.h.b16 %v80
    %v118 = vunpack.c.l.b16 %v81
    %v119 = vunpack.c.h.b16 %v81
    %v120 = vunpack.c.l.b16 %v82
    %v121 = vunpack.c.h.b16 %v82
    %v122 = vunpack.c.l.b16 %v83
    %v123 = vunpack.c.h.b16 %v83
    %v124 = vunpack.c.l.b16 %v84
    %v125 = vunpack.c.h.b16 %v84
    %v126 = vunpack.c.l.b16 %v85
    %v127 = vunpack.c.h.b16 %v85
    %v128 = vunpack.c.l.b16 %v86
    %v129 = vunpack.c.h.b16 %v86
    %v130 = vunpack.c.l.b16 %v87
    %v131 = vunpack.c.h.b16 %v87
    %v132 = vunpack.c.l.b16 %v88
    %v133 = vunpack.c.h.b16 %v88
    %v134 = vunpack.c.l.b16 %v89
    %v135 = vunpack.c.h.b16 %v89
    %v136 = vunpack.c.l.b16 %v90
    %v137 = vunpack.c.h.b16 %v90
    %v138 = vunpack.c.l.b16 %v91
    %v139 = vunpack.c.h.b16 %v91
    %v140 = vpack.c.b16 %v112, %v108
    %v141 = vpack.c.b16 %v113, %v109
    %v142 = vpack.c.b16 %v114, %v110
    %v143 = vpack.c.b16 %v115, %v111
    %v144 = vpack.c.b16 %v120, %v116
    %v145 = vpack.c.b16 %v121, %v117
    %v146 = vpack.c.b16 %v122, %v118
    %v147 = vpack.c.b16 %v123, %v119
    %v148 = vpack.c.b16 %v128, %v124
    %v149 = vpack.c.b16 %v129, %v125
    %v150 = vpack.c.b16 %v130, %v126
    %v151 = vpack.c.b16 %v131, %v127
    %v152 = vpack.c.b16 %v136, %v132
    %v153 = vpack.c.b16 %v137, %v133
    %v154 = vpack.c.b16 %v138, %v134
    %v155 = vpack.c.b16 %v139, %v135
    %vm172 = vcmask 523264
    %v174 = vsel %vm172, %v75, 0
    %176 = vmatprep.subr.bf16.mxu0 %v141
    %177 = vmatpush1.bf16.msra.mxu0 %v140
    %178 = vmatprep.subr.bf16.mxu0 %v145
    %179 = vmatpush1.bf16.msra.mxu0 %v144
    %180 = vmatprep.subr.bf16.mxu0 %v149
    %181 = vmatpush1.bf16.msra.mxu0 %v148
    %182 = vmatprep.subr.bf16.mxu0 %v153
    %183 = vmatpush1.bf16.msra.mxu0 %v152
    %184 = vmatprep.subr.bf16.mxu0 0
    %185 = vmatpush1.bf16.msra.mxu0 0
    %186 = vmatprep.subr.bf16.mxu0 0
    %187 = vmatpush1.bf16.msra.mxu0 0
    %188 = vmatprep.subr.bf16.mxu0 0
    %189 = vmatpush1.bf16.msra.mxu0 0
    %190 = vmatprep.subr.bf16.mxu0 0
    %191 = vmatpush1.bf16.msra.mxu0 0
    %192 = vmatprep.subr.bf16.mxu0 0
    %193 = vmatpush1.bf16.msra.mxu0 0
    %194 = vmatprep.subr.bf16.mxu0 0
    %195 = vmatpush1.bf16.msra.mxu0 0
    %196 = vmatprep.subr.bf16.mxu0 0
    %197 = vmatpush1.bf16.msra.mxu0 0
    %198 = vmatprep.subr.bf16.mxu0 0
    %199 = vmatpush1.bf16.msra.mxu0 0
    %200 = vmatprep.subr.bf16.mxu0 0
    %201 = vmatpush1.bf16.msra.mxu0 0
    %202 = vmatprep.subr.bf16.mxu0 0
    %203 = vmatpush1.bf16.msra.mxu0 0
    %204 = vmatprep.subr.bf16.mxu0 0
    %205 = vmatpush1.bf16.msra.mxu0 0
    %206 = vmatprep.subr.bf16.mxu0 0
    %207 = vmatpush1.bf16.msra.mxu0 0
    %208 = vmatprep.mubr.bf16.mxu0 0
    %209 = vmatmul.mubr.bf16.gmra.mrb[0].mxu0 %v174
    %v210 = vpop.f32.mrb[0].mxu0
    %v211 = vadd.f32 0.0, %v210
    %v212 = vpop.f32.mrb[0].mxu0
    %v213 = vadd.f32 0.0, %v212
    %v214 = vpop.f32.mrb[0].mxu0
    %v215 = vpop.f32.mrb[0].mxu0
    %216 = vdwg.mxu0
    %217 = vmatprep.subr.bf16.mxu0 %v143
    %218 = vmatpush1.bf16.msra.mxu0 %v142
    %219 = vmatprep.subr.bf16.mxu0 %v147
    %220 = vmatpush1.bf16.msra.mxu0 %v146
    %221 = vmatprep.subr.bf16.mxu0 %v151
    %222 = vmatpush1.bf16.msra.mxu0 %v150
    %223 = vmatprep.subr.bf16.mxu0 %v155
    %224 = vmatpush1.bf16.msra.mxu0 %v154
    %225 = vmatprep.subr.bf16.mxu0 0
    %226 = vmatpush1.bf16.msra.mxu0 0
    %227 = vmatprep.subr.bf16.mxu0 0
    %228 = vmatpush1.bf16.msra.mxu0 0
    %229 = vmatprep.subr.bf16.mxu0 0
    %230 = vmatpush1.bf16.msra.mxu0 0
    %231 = vmatprep.subr.bf16.mxu0 0
    %232 = vmatpush1.bf16.msra.mxu0 0
    %233 = vmatprep.subr.bf16.mxu0 0
    %234 = vmatpush1.bf16.msra.mxu0 0
    %235 = vmatprep.subr.bf16.mxu0 0
    %236 = vmatpush1.bf16.msra.mxu0 0
    %237 = vmatprep.subr.bf16.mxu0 0
    %238 = vmatpush1.bf16.msra.mxu0 0
    %239 = vmatprep.subr.bf16.mxu0 0
    %240 = vmatpush1.bf16.msra.mxu0 0
    %241 = vmatprep.subr.bf16.mxu0 0
    %242 = vmatpush1.bf16.msra.mxu0 0
    %243 = vmatprep.subr.bf16.mxu0 0
    %244 = vmatpush1.bf16.msra.mxu0 0
    %245 = vmatprep.subr.bf16.mxu0 0
    %246 = vmatpush1.bf16.msra.mxu0 0
    %247 = vmatprep.subr.bf16.mxu0 0
    %248 = vmatpush1.bf16.msra.mxu0 0
    %249 = vmatprep.mubr.bf16.mxu0 0
    %250 = vmatmul.mubr.bf16.gmra.mrb[0].mxu0 %v174
    %v251 = vpop.f32.mrb[0].mxu0
    %v252 = vadd.f32 0.0, %v251
    %v253 = vpop.f32.mrb[0].mxu0
    %v254 = vadd.f32 0.0, %v253
    %v255 = vpop.f32.mrb[0].mxu0
    %v256 = vpop.f32.mrb[0].mxu0
    %257 = vdwg.mxu0
    %v258 = vld [vmem:[%s2] sm:$0xf]
    %v259 = vld [vmem:[%s3] sm:$0xf]
    %v260 = vrot.slane %v211, 4
    %v261 = vadd.f32 %v211, %v260
    %v262 = vrot.slane %v261, 2
    %v263 = vadd.f32 %v261, %v262
    %v264 = vrot.slane %v263, 1
    %v265 = vadd.f32 %v263, %v264
    %v266 = vrot.slane %v213, 4
    %v267 = vadd.f32 %v213, %v266
    %v268 = vrot.slane %v267, 2
    %v269 = vadd.f32 %v267, %v268
    %v270 = vrot.slane %v269, 1
    %v271 = vadd.f32 %v269, %v270
    %v272 = vrot.slane %v252, 4
    %v273 = vadd.f32 %v252, %v272
    %v274 = vrot.slane %v273, 2
    %v275 = vadd.f32 %v273, %v274
    %v276 = vrot.slane %v275, 1
    %v277 = vadd.f32 %v275, %v276
    %v278 = vrot.slane %v254, 4
    %v279 = vadd.f32 %v254, %v278
    %v280 = vrot.slane %v279, 2
    %v281 = vadd.f32 %v279, %v280
    %v282 = vrot.slane %v281, 1
    %v283 = vadd.f32 %v281, %v282
    %v284 = vmul.f32 %v265, 0.125
    %v285 = vmul.f32 %v271, 0.125
    %v286 = vmul.f32 %v277, 0.125
    %v287 = vmul.f32 %v283, 0.125
    %v288 = vmul.f32 %v211, %v211
    %v289 = vmul.f32 %v213, %v213
    %v290 = vmul.f32 %v252, %v252
    %v291 = vmul.f32 %v254, %v254
    %v292 = vrot.slane %v288, 4
    %v293 = vadd.f32 %v288, %v292
    %v294 = vrot.slane %v293, 2
    %v295 = vadd.f32 %v293, %v294
    %v296 = vrot.slane %v295, 1
    %v297 = vadd.f32 %v295, %v296
    %v298 = vrot.slane %v289, 4
    %v299 = vadd.f32 %v289, %v298
    %v300 = vrot.slane %v299, 2
    %v301 = vadd.f32 %v299, %v300
    %v302 = vrot.slane %v301, 1
    %v303 = vadd.f32 %v301, %v302
    %v304 = vrot.slane %v290, 4
    %v305 = vadd.f32 %v290, %v304
    %v306 = vrot.slane %v305, 2
    %v307 = vadd.f32 %v305, %v306
    %v308 = vrot.slane %v307, 1
    %v309 = vadd.f32 %v307, %v308
    %v310 = vrot.slane %v291, 4
    %v311 = vadd.f32 %v291, %v310
    %v312 = vrot.slane %v311, 2
    %v313 = vadd.f32 %v311, %v312
    %v314 = vrot.slane %v313, 1
    %v315 = vadd.f32 %v313, %v314
    %v316 = vmul.f32 %v297, 0.125
    %v317 = vmul.f32 %v303, 0.125
    %v318 = vmul.f32 %v309, 0.125
    %v319 = vmul.f32 %v315, 0.125
    %v320 = vmul.f32 %v284, %v284
    %v321 = vmul.f32 %v285, %v285
    %v322 = vmul.f32 %v286, %v286
    %v323 = vmul.f32 %v287, %v287
    %v324 = vsub.f32 %v316, %v320
    %v325 = vsub.f32 %v317, %v321
    %v326 = vsub.f32 %v318, %v322
    %v327 = vsub.f32 %v319, %v323
    %v328 = vadd.f32 %v324, 1e-05
    %v329 = vadd.f32 %v325, 1e-05
    %v330 = vadd.f32 %v326, 1e-05
    %v331 = vadd.f32 %v327, 1e-05
    %v332 = vrsqrt.pop %v328
    %v333 = vrsqrt.pop %v329
    %v334 = vrsqrt.pop %v330
    %v335 = vrsqrt.pop %v331
    %v340 = vcombine.low %v332, %v333
    %v341 = vcombine.low %v334, %v335
    %v343 = vunpack.c.l.s4 1966171168
    %v344 = vunpack.c.0.s8 %v343
    %v345 = vlaneseq
    %v346 = vshrl.u32 %v345, 7
    %v347 = vsub.s32 %v344, %v346
    %v348 = vrot.slane %v340, %v347
    %v350 = vunpack.c.l.s4 1966171168
    %v351 = vunpack.c.0.s8 %v350
    %v352 = vlaneseq
    %v353 = vshrl.u32 %v352, 7
    %v354 = vsub.s32 %v351, %v353
    %v355 = vrot.slane %v341, %v354
    %v356 = vcombine.low %v348, %v355
    %v358 = vunpack.c.l.s4 1966171168
    %v359 = vunpack.c.0.s8 %v358
    %v360 = vlaneseq
    %v361 = vshrl.u32 %v360, 7
    %v362 = vsub.s32 %v359, %v361
    %v363 = vrot.slane %v356, %v362
    %v365 = vmul.f32 %v258, %v363
    %v367 = vlaneseq
    %v368 = vshrl.u32 %v367, 7
    %v369 = vsub.s32 0, %v368
    %v370 = vrot.slane %v365, %v369
    %v371 = vlaneseq
    %v372 = vshrl.u32 %v371, 7
    %v373 = vsub.s32 1, %v372
    %v374 = vrot.slane %v365, %v373
    %v375 = vlaneseq
    %v376 = vshrl.u32 %v375, 7
    %v377 = vsub.s32 2, %v376
    %v378 = vrot.slane %v365, %v377
    %v379 = vlaneseq
    %v380 = vshrl.u32 %v379, 7
    %v381 = vsub.s32 3, %v380
    %v382 = vrot.slane %v365, %v381
    %v387 = vmul.f32 %v284, %v370
    %v388 = vmul.f32 %v285, %v374
    %v389 = vmul.f32 %v286, %v378
    %v390 = vmul.f32 %v287, %v382
    %v395 = vcombine.low %v387, %v388
    %v396 = vcombine.low %v389, %v390
    %v398 = vunpack.c.l.s4 1966171168
    %v399 = vunpack.c.0.s8 %v398
    %v400 = vlaneseq
    %v401 = vshrl.u32 %v400, 7
    %v402 = vsub.s32 %v399, %v401
    %v403 = vrot.slane %v395, %v402
    %v405 = vunpack.c.l.s4 1966171168
    %v406 = vunpack.c.0.s8 %v405
    %v407 = vlaneseq
    %v408 = vshrl.u32 %v407, 7
    %v409 = vsub.s32 %v406, %v408
    %v410 = vrot.slane %v396, %v409
    %v411 = vcombine.low %v403, %v410
    %v413 = vunpack.c.l.s4 1966171168
    %v414 = vunpack.c.0.s8 %v413
    %v415 = vlaneseq
    %v416 = vshrl.u32 %v415, 7
    %v417 = vsub.s32 %v414, %v416
    %v418 = vrot.slane %v411, %v417
    %v420 = vsub.f32 %v259, %v418
    %v421 = vmul.f32 %v211, %v370
    %v422 = vmul.f32 %v213, %v374
    %v423 = vmul.f32 %v252, %v378
    %v424 = vmul.f32 %v254, %v382
    %v426 = vlaneseq
    %v427 = vshrl.u32 %v426, 7
    %v428 = vsub.s32 0, %v427
    %v429 = vrot.slane %v420, %v428
    %v430 = vlaneseq
    %v431 = vshrl.u32 %v430, 7
    %v432 = vsub.s32 1, %v431
    %v433 = vrot.slane %v420, %v432
    %v434 = vlaneseq
    %v435 = vshrl.u32 %v434, 7
    %v436 = vsub.s32 2, %v435
    %v437 = vrot.slane %v420, %v436
    %v438 = vlaneseq
    %v439 = vshrl.u32 %v438, 7
    %v440 = vsub.s32 3, %v439
    %v441 = vrot.slane %v420, %v440
    %v446 = vadd.f32 %v421, %v429
    %v447 = vadd.f32 %v422, %v433
    %v448 = vadd.f32 %v423, %v437
    %v449 = vadd.f32 %v424, %v441
    %v450 = vmax.f32 %v446, 0.0
    %v451 = vmax.f32 %v447, 0.0
    %v452 = vmax.f32 %v448, 0.0
    %v453 = vmax.f32 %v449, 0.0
    %v454 = vpack.c.bf16 %v450, %v450
    %v455 = vpack.c.bf16 %v451, %v451
    %v456 = vpack.c.bf16 %v452, %v452
    %v457 = vpack.c.bf16 %v453, %v453
    %v458 = vld [vmem:[#allocation7] sm:$0xff]
    %v459 = vld [vmem:[#allocation7 + $0x8] sm:$0xff]
    %v460 = vld [vmem:[#allocation7 + $0x10] sm:$0xff]
    %v461 = vld [vmem:[#allocation7 + $0x18] sm:$0xff]
    %v462 = vld [vmem:[#allocation7 + $0x20] sm:$0xff]
    %v463 = vld [vmem:[#allocation7 + $0x28] sm:$0xff]
    %v464 = vld [vmem:[#allocation7 + $0x30] sm:$0xff]
    %v465 = vld [vmem:[#allocation7 + $0x38] sm:$0xff]
    %v466 = vld [vmem:[#allocation7 + $0x40] sm:$0xff]
    %v467 = vld [vmem:[#allocation7 + $0x48] sm:$0xff]
    %v468 = vld [vmem:[#allocation7 + $0x50] sm:$0xff]
    %v469 = vld [vmem:[#allocation7 + $0x58] sm:$0xff]
    %v470 = vld [vmem:[#allocation7 + $0x60] sm:$0xff]
    %v471 = vld [vmem:[#allocation7 + $0x68] sm:$0xff]
    %v472 = vld [vmem:[#allocation7 + $0x70] sm:$0xff]
    %v473 = vld [vmem:[#allocation7 + $0x78] sm:$0xff]
    %v474 = vld [vmem:[#allocation7 + $0x80] sm:$0xff]
    %v475 = vld [vmem:[#allocation7 + $0x88] sm:$0xff]
    %v476 = vld [vmem:[#allocation7 + $0x90] sm:$0xff]
    %v477 = vld [vmem:[#allocation7 + $0x98] sm:$0xff]
    %v478 = vld [vmem:[#allocation7 + $0xa0] sm:$0xff]
    %v479 = vld [vmem:[#allocation7 + $0xa8] sm:$0xff]
    %v480 = vld [vmem:[#allocation7 + $0xb0] sm:$0xff]
    %v481 = vld [vmem:[#allocation7 + $0xb8] sm:$0xff]
    %v482 = vld [vmem:[#allocation7 + $0xc0] sm:$0xff]
    %v483 = vld [vmem:[#allocation7 + $0xc8] sm:$0xff]
    %v484 = vld [vmem:[#allocation7 + $0xd0] sm:$0xff]
    %v485 = vld [vmem:[#allocation7 + $0xd8] sm:$0xff]
    %v486 = vld [vmem:[#allocation7 + $0xe0] sm:$0xff]
    %v487 = vld [vmem:[#allocation7 + $0xe8] sm:$0xff]
    %v488 = vld [vmem:[#allocation7 + $0xf0] sm:$0xff]
    %v489 = vld [vmem:[#allocation7 + $0xf8] sm:$0xff]
    %v490 = vld [vmem:[#allocation7 + $0x100] sm:$0xff]
    %v491 = vld [vmem:[#allocation7 + $0x108] sm:$0xff]
    %v492 = vld [vmem:[#allocation7 + $0x110] sm:$0xff]
    %v493 = vld [vmem:[#allocation7 + $0x118] sm:$0xff]
    %v494 = vld [vmem:[#allocation7 + $0x120] sm:$0xff]
    %v495 = vld [vmem:[#allocation7 + $0x128] sm:$0xff]
    %v496 = vld [vmem:[#allocation7 + $0x130] sm:$0xff]
    %v497 = vld [vmem:[#allocation7 + $0x138] sm:$0xff]
    %v498 = vld [vmem:[#allocation7 + $0x140] sm:$0xff]
    %v499 = vld [vmem:[#allocation7 + $0x148] sm:$0xff]
    %v500 = vld [vmem:[#allocation7 + $0x150] sm:$0xff]
    %v501 = vld [vmem:[#allocation7 + $0x158] sm:$0xff]
    %v502 = vld [vmem:[#allocation7 + $0x160] sm:$0xff]
    %v503 = vld [vmem:[#allocation7 + $0x168] sm:$0xff]
    %v504 = vld [vmem:[#allocation7 + $0x170] sm:$0xff]
    %v505 = vld [vmem:[#allocation7 + $0x178] sm:$0xff]
    %v506 = vld [vmem:[#allocation7 + $0x180] sm:$0xff]
    %v507 = vld [vmem:[#allocation7 + $0x188] sm:$0xff]
    %v508 = vld [vmem:[#allocation7 + $0x190] sm:$0xff]
    %v509 = vld [vmem:[#allocation7 + $0x198] sm:$0xff]
    %v510 = vld [vmem:[#allocation7 + $0x1a0] sm:$0xff]
    %v511 = vld [vmem:[#allocation7 + $0x1a8] sm:$0xff]
    %v512 = vld [vmem:[#allocation7 + $0x1b0] sm:$0xff]
    %v513 = vld [vmem:[#allocation7 + $0x1b8] sm:$0xff]
    %v514 = vld [vmem:[#allocation7 + $0x1c0] sm:$0xff]
    %v515 = vld [vmem:[#allocation7 + $0x1c8] sm:$0xff]
    %v516 = vld [vmem:[#allocation7 + $0x1d0] sm:$0xff]
    %v517 = vld [vmem:[#allocation7 + $0x1d8] sm:$0xff]
    %v518 = vld [vmem:[#allocation7 + $0x1e0] sm:$0xff]
    %v519 = vld [vmem:[#allocation7 + $0x1e8] sm:$0xff]
    %v520 = vld [vmem:[#allocation7 + $0x1f0] sm:$0xff]
    %v521 = vld [vmem:[#allocation7 + $0x1f8] sm:$0xff]
    %v586 = vunpack.c.l.b16 %v458
    %v587 = vunpack.c.h.b16 %v458
    %v588 = vunpack.c.l.b16 %v459
    %v589 = vunpack.c.h.b16 %v459
    %v590 = vunpack.c.l.b16 %v460
    %v591 = vunpack.c.h.b16 %v460
    %v592 = vunpack.c.l.b16 %v461
    %v593 = vunpack.c.h.b16 %v461
    %v594 = vunpack.c.l.b16 %v462
    %v595 = vunpack.c.h.b16 %v462
    %v596 = vunpack.c.l.b16 %v463
    %v597 = vunpack.c.h.b16 %v463
    %v598 = vunpack.c.l.b16 %v464
    %v599 = vunpack.c.h.b16 %v464
    %v600 = vunpack.c.l.b16 %v465
    %v601 = vunpack.c.h.b16 %v465
    %v602 = vunpack.c.l.b16 %v466
    %v603 = vunpack.c.h.b16 %v466
    %v604 = vunpack.c.l.b16 %v467
    %v605 = vunpack.c.h.b16 %v467
    %v606 = vunpack.c.l.b16 %v468
    %v607 = vunpack.c.h.b16 %v468
    %v608 = vunpack.c.l.b16 %v469
    %v609 = vunpack.c.h.b16 %v469
    %v610 = vunpack.c.l.b16 %v470
    %v611 = vunpack.c.h.b16 %v470
    %v612 = vunpack.c.l.b16 %v471
    %v613 = vunpack.c.h.b16 %v471
    %v614 = vunpack.c.l.b16 %v472
    %v615 = vunpack.c.h.b16 %v472
    %v616 = vunpack.c.l.b16 %v473
    %v617 = vunpack.c.h.b16 %v473
    %v618 = vunpack.c.l.b16 %v474
    %v619 = vunpack.c.h.b16 %v474
    %v620 = vunpack.c.l.b16 %v475
    %v621 = vunpack.c.h.b16 %v475
    %v622 = vunpack.c.l.b16 %v476
    %v623 = vunpack.c.h.b16 %v476
    %v624 = vunpack.c.l.b16 %v477
    %v625 = vunpack.c.h.b16 %v477
    %v626 = vunpack.c.l.b16 %v478
    %v627 = vunpack.c.h.b16 %v478
    %v628 = vunpack.c.l.b16 %v479
    %v629 = vunpack.c.h.b16 %v479
    %v630 = vunpack.c.l.b16 %v480
    %v631 = vunpack.c.h.b16 %v480
    %v632 = vunpack.c.l.b16 %v481
    %v633 = vunpack.c.h.b16 %v481
    %v634 = vunpack.c.l.b16 %v482
    %v635 = vunpack.c.h.b16 %v482
    %v636 = vunpack.c.l.b16 %v483
    %v637 = vunpack.c.h.b16 %v483
    %v638 = vunpack.c.l.b16 %v484
    %v639 = vunpack.c.h.b16 %v484
    %v640 = vunpack.c.l.b16 %v485
    %v641 = vunpack.c.h.b16 %v485
    %v642 = vunpack.c.l.b16 %v486
    %v643 = vunpack.c.h.b16 %v486
    %v644 = vunpack.c.l.b16 %v487
    %v645 = vunpack.c.h.b16 %v487
    %v646 = vunpack.c.l.b16 %v488
    %v647 = vunpack.c.h.b16 %v488
    %v648 = vunpack.c.l.b16 %v489
    %v649 = vunpack.c.h.b16 %v489
    %v650 = vunpack.c.l.b16 %v490
    %v651 = vunpack.c.h.b16 %v490
    %v652 = vunpack.c.l.b16 %v491
    %v653 = vunpack.c.h.b16 %v491
    %v654 = vunpack.c.l.b16 %v492
    %v655 = vunpack.c.h.b16 %v492
    %v656 = vunpack.c.l.b16 %v493
    %v657 = vunpack.c.h.b16 %v493
    %v658 = vunpack.c.l.b16 %v494
    %v659 = vunpack.c.h.b16 %v494
    %v660 = vunpack.c.l.b16 %v495
    %v661 = vunpack.c.h.b16 %v495
    %v662 = vunpack.c.l.b16 %v496
    %v663 = vunpack.c.h.b16 %v496
    %v664 = vunpack.c.l.b16 %v497
    %v665 = vunpack.c.h.b16 %v497
    %v666 = vunpack.c.l.b16 %v498
    %v667 = vunpack.c.h.b16 %v498
    %v668 = vunpack.c.l.b16 %v499
    %v669 = vunpack.c.h.b16 %v499
    %v670 = vunpack.c.l.b16 %v500
    %v671 = vunpack.c.h.b16 %v500
    %v672 = vunpack.c.l.b16 %v501
    %v673 = vunpack.c.h.b16 %v501
    %v674 = vunpack.c.l.b16 %v502
    %v675 = vunpack.c.h.b16 %v502
    %v676 = vunpack.c.l.b16 %v503
    %v677 = vunpack.c.h.b16 %v503
    %v678 = vunpack.c.l.b16 %v504
    %v679 = vunpack.c.h.b16 %v504
    %v680 = vunpack.c.l.b16 %v505
    %v681 = vunpack.c.h.b16 %v505
    %v682 = vunpack.c.l.b16 %v506
    %v683 = vunpack.c.h.b16 %v506
    %v684 = vunpack.c.l.b16 %v507
    %v685 = vunpack.c.h.b16 %v507
    %v686 = vunpack.c.l.b16 %v508
    %v687 = vunpack.c.h.b16 %v508
    %v688 = vunpack.c.l.b16 %v509
    %v689 = vunpack.c.h.b16 %v509
    %v690 = vunpack.c.l.b16 %v510
    %v691 = vunpack.c.h.b16 %v510
    %v692 = vunpack.c.l.b16 %v511
    %v693 = vunpack.c.h.b16 %v511
    %v694 = vunpack.c.l.b16 %v512
    %v695 = vunpack.c.h.b16 %v512
    %v696 = vunpack.c.l.b16 %v513
    %v697 = vunpack.c.h.b16 %v513
    %v698 = vunpack.c.l.b16 %v514
    %v699 = vunpack.c.h.b16 %v514
    %v700 = vunpack.c.l.b16 %v515
    %v701 = vunpack.c.h.b16 %v515
    %v702 = vunpack.c.l.b16 %v516
    %v703 = vunpack.c.h.b16 %v516
    %v704 = vunpack.c.l.b16 %v517
    %v705 = vunpack.c.h.b16 %v517
    %v706 = vunpack.c.l.b16 %v518
    %v707 = vunpack.c.h.b16 %v518
    %v708 = vunpack.c.l.b16 %v519
    %v709 = vunpack.c.h.b16 %v519
    %v710 = vunpack.c.l.b16 %v520
    %v711 = vunpack.c.h.b16 %v520
    %v712 = vunpack.c.l.b16 %v521
    %v713 = vunpack.c.h.b16 %v521
    %v714 = vpack.c.b16 %v588, %v586
    %v715 = vpack.c.b16 %v589, %v587
    %v716 = vpack.c.b16 %v592, %v590
    %v717 = vpack.c.b16 %v593, %v591
    %v718 = vpack.c.b16 %v596, %v594
    %v719 = vpack.c.b16 %v597, %v595
    %v720 = vpack.c.b16 %v600, %v598
    %v721 = vpack.c.b16 %v601, %v599
    %v722 = vpack.c.b16 %v604, %v602
    %v723 = vpack.c.b16 %v605, %v603
    %v724 = vpack.c.b16 %v608, %v606
    %v725 = vpack.c.b16 %v609, %v607
    %v726 = vpack.c.b16 %v612, %v610
    %v727 = vpack.c.b16 %v613, %v611
    %v728 = vpack.c.b16 %v616, %v614
    %v729 = vpack.c.b16 %v617, %v615
    %v730 = vpack.c.b16 %v620, %v618
    %v731 = vpack.c.b16 %v621, %v619
    %v732 = vpack.c.b16 %v624, %v622
    %v733 = vpack.c.b16 %v625, %v623
    %v734 = vpack.c.b16 %v628, %v626
    %v735 = vpack.c.b16 %v629, %v627
    %v736 = vpack.c.b16 %v632, %v630
    %v737 = vpack.c.b16 %v633, %v631
    %v738 = vpack.c.b16 %v636, %v634
    %v739 = vpack.c.b16 %v637, %v635
    %v740 = vpack.c.b16 %v640, %v638
    %v741 = vpack.c.b16 %v641, %v639
    %v742 = vpack.c.b16 %v644, %v642
    %v743 = vpack.c.b16 %v645, %v643
    %v744 = vpack.c.b16 %v648, %v646
    %v745 = vpack.c.b16 %v649, %v647
    %v746 = vpack.c.b16 %v652, %v650
    %v747 = vpack.c.b16 %v653, %v651
    %v748 = vpack.c.b16 %v656, %v654
    %v749 = vpack.c.b16 %v657, %v655
    %v750 = vpack.c.b16 %v660, %v658
    %v751 = vpack.c.b16 %v661, %v659
    %v752 = vpack.c.b16 %v664, %v662
    %v753 = vpack.c.b16 %v665, %v663
    %v754 = vpack.c.b16 %v668, %v666
    %v755 = vpack.c.b16 %v669, %v667
    %v756 = vpack.c.b16 %v672, %v670
    %v757 = vpack.c.b16 %v673, %v671
    %v758 = vpack.c.b16 %v676, %v674
    %v759 = vpack.c.b16 %v677, %v675
    %v760 = vpack.c.b16 %v680, %v678
    %v761 = vpack.c.b16 %v681, %v679
    %v762 = vpack.c.b16 %v684, %v682
    %v763 = vpack.c.b16 %v685, %v683
    %v764 = vpack.c.b16 %v688, %v686
    %v765 = vpack.c.b16 %v689, %v687
    %v766 = vpack.c.b16 %v692, %v690
    %v767 = vpack.c.b16 %v693, %v691
    %v768 = vpack.c.b16 %v696, %v694
    %v769 = vpack.c.b16 %v697, %v695
    %v770 = vpack.c.b16 %v700, %v698
    %v771 = vpack.c.b16 %v701, %v699
    %v772 = vpack.c.b16 %v704, %v702
    %v773 = vpack.c.b16 %v705, %v703
    %v774 = vpack.c.b16 %v708, %v706
    %v775 = vpack.c.b16 %v709, %v707
    %v776 = vpack.c.b16 %v712, %v710
    %v777 = vpack.c.b16 %v713, %v711
    %842 = vmatprep.subr.bf16.mxu0 %v715
    %843 = vmatpush1.bf16.msra.mxu0 %v714
    %844 = vmatprep.subr.bf16.mxu0 %v717
    %845 = vmatpush1.bf16.msra.mxu0 %v716
    %846 = vmatprep.subr.bf16.mxu0 %v719
    %847 = vmatpush1.bf16.msra.mxu0 %v718
    %848 = vmatprep.subr.bf16.mxu0 %v721
    %849 = vmatpush1.bf16.msra.mxu0 %v720
    %850 = vmatprep.subr.bf16.mxu0 %v723
    %851 = vmatpush1.bf16.msra.mxu0 %v722
    %852 = vmatprep.subr.bf16.mxu0 %v725
    %853 = vmatpush1.bf16.msra.mxu0 %v724
    %854 = vmatprep.subr.bf16.mxu0 %v727
    %855 = vmatpush1.bf16.msra.mxu0 %v726
    %856 = vmatprep.subr.bf16.mxu0 %v729
    %857 = vmatpush1.bf16.msra.mxu0 %v728
    %858 = vmatprep.subr.bf16.mxu0 %v731
    %859 = vmatpush1.bf16.msra.mxu0 %v730
    %860 = vmatprep.subr.bf16.mxu0 %v733
    %861 = vmatpush1.bf16.msra.mxu0 %v732
    %862 = vmatprep.subr.bf16.mxu0 %v735
    %863 = vmatpush1.bf16.msra.mxu0 %v734
    %864 = vmatprep.subr.bf16.mxu0 %v737
    %865 = vmatpush1.bf16.msra.mxu0 %v736
    %866 = vmatprep.subr.bf16.mxu0 %v739
    %867 = vmatpush1.bf16.msra.mxu0 %v738
    %868 = vmatprep.subr.bf16.mxu0 %v741
    %869 = vmatpush1.bf16.msra.mxu0 %v740
    %870 = vmatprep.subr.bf16.mxu0 %v743
    %871 = vmatpush1.bf16.msra.mxu0 %v742
    %872 = vmatprep.subr.bf16.mxu0 %v745
    %873 = vmatpush1.bf16.msra.mxu0 %v744
    %874 = vmatprep.mubr.bf16.mxu0 %v455
    %875 = vmatmul.mubr.bf16.gmra.mrb[0].mxu0 %v454
    %v876 = vpop.f32.mrb[0].mxu0
    %v877 = vadd.f32 0.0, %v876
    %v878 = vpop.f32.mrb[0].mxu0
    %v879 = vadd.f32 0.0, %v878
    %v880 = vpop.f32.mrb[0].mxu0
    %v881 = vpop.f32.mrb[0].mxu0
    %882 = vdwg.mxu0
    %883 = vmatprep.subr.bf16.mxu0 %v747
    %884 = vmatpush1.bf16.msra.mxu0 %v746
    %885 = vmatprep.subr.bf16.mxu0 %v749
    %886 = vmatpush1.bf16.msra.mxu0 %v748
    %887 = vmatprep.subr.bf16.mxu0 %v751
    %888 = vmatpush1.bf16.msra.mxu0 %v750
    %889 = vmatprep.subr.bf16.mxu0 %v753
    %890 = vmatpush1.bf16.msra.mxu0 %v752
    %891 = vmatprep.subr.bf16.mxu0 %v755
    %892 = vmatpush1.bf16.msra.mxu0 %v754
    %893 = vmatprep.subr.bf16.mxu0 %v757
    %894 = vmatpush1.bf16.msra.mxu0 %v756
    %895 = vmatprep.subr.bf16.mxu0 %v759
    %896 = vmatpush1.bf16.msra.mxu0 %v758
    %897 = vmatprep.subr.bf16.mxu0 %v761
    %898 = vmatpush1.bf16.msra.mxu0 %v760
    %899 = vmatprep.subr.bf16.mxu0 %v763
    %900 = vmatpush1.bf16.msra.mxu0 %v762
    %901 = vmatprep.subr.bf16.mxu0 %v765
    %902 = vmatpush1.bf16.msra.mxu0 %v764
    %903 = vmatprep.subr.bf16.mxu0 %v767
    %904 = vmatpush1.bf16.msra.mxu0 %v766
    %905 = vmatprep.subr.bf16.mxu0 %v769
    %906 = vmatpush1.bf16.msra.mxu0 %v768
    %907 = vmatprep.subr.bf16.mxu0 %v771
    %908 = vmatpush1.bf16.msra.mxu0 %v770
    %909 = vmatprep.subr.bf16.mxu0 %v773
    %910 = vmatpush1.bf16.msra.mxu0 %v772
    %911 = vmatprep.subr.bf16.mxu0 %v775
    %912 = vmatpush1.bf16.msra.mxu0 %v774
    %913 = vmatprep.subr.bf16.mxu0 %v777
    %914 = vmatpush1.bf16.msra.mxu0 %v776
    %915 = vmatprep.mubr.bf16.mxu0 %v457
    %916 = vmatmul.mubr.bf16.gmra.mrb[0].mxu0 %v456
    %v917 = vpop.f32.mrb[0].mxu0
    %v918 = vadd.f32 %v877, %v917
    %v919 = vpop.f32.mrb[0].mxu0
    %v920 = vadd.f32 %v879, %v919
    %v921 = vpop.f32.mrb[0].mxu0
    %v922 = vpop.f32.mrb[0].mxu0
    %923 = vdwg.mxu0
    %v924 = vld [vmem:[%s5] sm:$0x3]
    %v925 = vld [vmem:[%s6] sm:$0x3]
    %v926 = vrot.slane %v918, 4
    %v927 = vadd.f32 %v918, %v926
    %v928 = vrot.slane %v927, 2
    %v929 = vadd.f32 %v927, %v928
    %v930 = vrot.slane %v929, 1
    %v931 = vadd.f32 %v929, %v930
    %v932 = vrot.slane %v920, 4
    %v933 = vadd.f32 %v920, %v932
    %v934 = vrot.slane %v933, 2
    %v935 = vadd.f32 %v933, %v934
    %v936 = vrot.slane %v935, 1
    %v937 = vadd.f32 %v935, %v936
    %v938 = vmul.f32 %v931, 0.125
    %v939 = vmul.f32 %v937, 0.125
    %v940 = vmul.f32 %v918, %v918
    %v941 = vmul.f32 %v920, %v920
    %v942 = vrot.slane %v940, 4
    %v943 = vadd.f32 %v940, %v942
    %v944 = vrot.slane %v943, 2
    %v945 = vadd.f32 %v943, %v944
    %v946 = vrot.slane %v945, 1
    %v947 = vadd.f32 %v945, %v946
    %v948 = vrot.slane %v941, 4
    %v949 = vadd.f32 %v941, %v948
    %v950 = vrot.slane %v949, 2
    %v951 = vadd.f32 %v949, %v950
    %v952 = vrot.slane %v951, 1
    %v953 = vadd.f32 %v951, %v952
    %v954 = vmul.f32 %v947, 0.125
    %v955 = vmul.f32 %v953, 0.125
    %v956 = vmul.f32 %v938, %v938
    %v957 = vmul.f32 %v939, %v939
    %v958 = vsub.f32 %v954, %v956
    %v959 = vsub.f32 %v955, %v957
    %v960 = vadd.f32 %v958, 1e-05
    %v961 = vadd.f32 %v959, 1e-05
    %v962 = vrsqrt.pop %v960
    %v963 = vrsqrt.pop %v961
    %v966 = vcombine.low %v962, %v963
    %v968 = vunpack.c.l.s4 1966171168
    %v969 = vunpack.c.0.s8 %v968
    %v970 = vlaneseq
    %v971 = vshrl.u32 %v970, 7
    %v972 = vsub.s32 %v969, %v971
    %v973 = vrot.slane %v966, %v972
    %v975 = vunpack.c.l.s4 1966171168
    %v976 = vunpack.c.0.s8 %v975
    %v977 = vlaneseq
    %v978 = vshrl.u32 %v977, 7
    %v979 = vsub.s32 %v976, %v978
    %v980 = vrot.slane %v973, %v979
    %v982 = vmul.f32 %v924, %v980
    %v984 = vlaneseq
    %v985 = vshrl.u32 %v984, 7
    %v986 = vsub.s32 0, %v985
    %v987 = vrot.slane %v982, %v986
    %v988 = vlaneseq
    %v989 = vshrl.u32 %v988, 7
    %v990 = vsub.s32 1, %v989
    %v991 = vrot.slane %v982, %v990
    %v994 = vmul.f32 %v938, %v987
    %v995 = vmul.f32 %v939, %v991
    %v998 = vcombine.low %v994, %v995
    %v1000 = vunpack.c.l.s4 1966171168
    %v1001 = vunpack.c.0.s8 %v1000
    %v1002 = vlaneseq
    %v1003 = vshrl.u32 %v1002, 7
    %v1004 = vsub.s32 %v1001, %v1003
    %v1005 = vrot.slane %v998, %v1004
    %v1007 = vunpack.c.l.s4 1966171168
    %v1008 = vunpack.c.0.s8 %v1007
    %v1009 = vlaneseq
    %v1010 = vshrl.u32 %v1009, 7
    %v1011 = vsub.s32 %v1008, %v1010
    %v1012 = vrot.slane %v1005, %v1011
    %v1014 = vsub.f32 %v925, %v1012
    %v1015 = vmul.f32 %v918, %v987
    %v1016 = vmul.f32 %v920, %v991
    %v1018 = vlaneseq
    %v1019 = vshrl.u32 %v1018, 7
    %v1020 = vsub.s32 0, %v1019
    %v1021 = vrot.slane %v1014, %v1020
    %v1022 = vlaneseq
    %v1023 = vshrl.u32 %v1022, 7
    %v1024 = vsub.s32 1, %v1023
    %v1025 = vrot.slane %v1014, %v1024
    %v1028 = vadd.f32 %v1015, %v1021
    %v1029 = vadd.f32 %v1016, %v1025
    %v1030 = vmax.f32 %v1028, 0.0
    %v1031 = vmax.f32 %v1029, 0.0
    %v1032 = vld [vmem:[%s7] sm:$0x3]
    %v1034 = vlaneseq
    %v1035 = vshrl.u32 %v1034, 7
    %v1036 = vsub.s32 0, %v1035
    %v1037 = vrot.slane %v1032, %v1036
    %v1038 = vlaneseq
    %v1039 = vshrl.u32 %v1038, 7
    %v1040 = vsub.s32 1, %v1039
    %v1041 = vrot.slane %v1032, %v1040
    %v1044 = vmul.f32 %v1030, %v1037
    %v1045 = vmul.f32 %v1031, %v1041
    %v1046 = vadd.f32 %v1044, %v1045
    %1047 = vadd.xlane.f32.xlu0 %v1046
    %v1048 = vpop.xlane.xlu0 %1047
    %v1049 = vld [vmem:[#allocation2] sm:$0x1]
    %v1051 = vlaneseq
    %v1052 = vshrl.u32 %v1051, 7
    %v1053 = vsub.s32 0, %v1052
    %v1054 = vrot.slane %v1049, %v1053
    %v1056 = vadd.f32 %v1048, %v1054
    %vm1057 = vcmask 7168
    %1058 = vst.msk [vmem:[%s9] sm:$0xff] %vm1057, %v1056
    // Predicated region
    $region50: #{tpu_custom_call.1} parent=1 // pred_check
      _
    $region51: #{tpu_custom_call.1} parent=1 // pred_check_branch
      %1060 = sbr.rel (0) target = $region53
    $region52: #{tpu_custom_call.1} parent=1 // pred_region
      _
    $region53: #{tpu_custom_call.1} parent=1 // pred_fallthru
      _
    // Predicated region
    $region54: #{tpu_custom_call.1} parent=1 // pred_check
      _
    $region55: #{tpu_custom_call.1} parent=1 // pred_check_branch
      %1062 = sbr.rel (0) target = $region57
    $region56: #{tpu_custom_call.1} parent=1 // pred_region
      _
    $region57: #{tpu_custom_call.1} parent=1 // pred_fallthru
      _
    %1063 = vsyncpa [#allocation4], 1
    %1064 = vsyncpa [#allocation6], 1

</llo_original>
